<compile_context>
chip_gen: v5e
topology: v5e:2x2
jax: 0.10.0
libtpu: 0.0.40
codegen_flags: <defaults>
</compile_context>

<pallas_src>
import jax
import jax.numpy as jnp
from jax import lax
from jax.experimental import pallas as pl
from jax.experimental.pallas import tpu as pltpu


def make_mha_kernel(dk, compute_dtype):
    scale = 1.0 / (dk ** 0.5)

    def kernel(q_ref, k_ref, v_ref, wq_ref, bq_ref, wk_ref, bk_ref, o_ref):
        # Block views (one batch element, one head, one query tile):
        #   q_ref : (1, TQ, D)     compute_dtype
        #   k_ref : (1, S,  D)     compute_dtype
        #   v_ref : (1, 1, S, dk)  compute_dtype   (head slice of value)
        #   wq_ref/wk_ref : (1, D, dk)  compute_dtype, already (in, out)
        #   bq_ref/bk_ref : (1, 1, dk)  float32
        #   o_ref : (1, 1, TQ, dk)
        q = q_ref[0]          # (TQ, D)
        k = k_ref[0]          # (S, D)
        vh = v_ref[0, 0]      # (S, dk)
        wq = wq_ref[0]        # (D, dk)   no in-kernel transpose
        wk = wk_ref[0]
        bq = bq_ref[0]        # (1, dk) f32
        bk = bk_ref[0]

        # Head projections on the MXU: bf16 operands, f32 accumulation.
        qh = jnp.dot(q, wq, preferred_element_type=jnp.float32) + bq   # (TQ, dk)
        kh = jnp.dot(k, wk, preferred_element_type=jnp.float32) + bk   # (S, dk)

        # Fold the 1/sqrt(dk) scale into the (small) Q tile, then drop to
        # compute dtype for the score matmul.
        qh = (qh * scale).astype(compute_dtype)
        kh = kh.astype(compute_dtype)

        # Scores (TQ, S): contract the dk axes directly (no explicit .T).
        s = lax.dot_general(qh, kh, (((1,), (1,)), ((), ())),
                            preferred_element_type=jnp.float32)

        # Numerically stable softmax in f32; reciprocal on the EUP.
        s = s - jnp.max(s, axis=-1, keepdims=True)
        p = jnp.exp(s)
        p = p * pl.reciprocal(jnp.sum(p, axis=-1, keepdims=True), approx=True)

        # PV matmul (bf16 operands, f32 accumulate) and ONE dense block store.
        oh = jnp.dot(p.astype(compute_dtype), vh,
                     preferred_element_type=jnp.float32)                # (TQ, dk)
        o_ref[0, 0] = oh.astype(o_ref.dtype)

    return kernel


def _pick_q_tile(S, max_tile=256):
    if S <= max_tile:
        return S
    for t in (max_tile, 128, 64, 32, 16, 8):
        if S % t == 0:
            return t
    return S


def multi_head_attention(query, key, value, wq, bq, wk, bk, attn_heads,
                         *, compute_dtype=jnp.bfloat16):
    """query/key/value: (B, S, d_model); wq/wk: (d_model, d_model) PyTorch
    (out, in) layout; bq/bk: (d_model,)."""
    B, S, D = query.shape
    H = attn_heads
    assert D % H == 0
    dk = D // H

    TQ = _pick_q_tile(S)
    QT = S // TQ

    # --- One-time parameter relayout in the wrapper (not per grid step) ----
    # PyTorch Linear weight is (out, in); kernel wants (in, out), head-sliced.
    wq_h = wq.T.reshape(D, H, dk).transpose(1, 0, 2).astype(compute_dtype)  # (H, D, dk)
    wk_h = wk.T.reshape(D, H, dk).transpose(1, 0, 2).astype(compute_dtype)
    bq_h = bq.reshape(H, 1, dk).astype(jnp.float32)                          # (H, 1, dk)
    bk_h = bk.reshape(H, 1, dk).astype(jnp.float32)

    # Activations to compute dtype (halves HBM traffic / VMEM); value is
    # head-split so each grid step only loads its (S, dk) slice.
    q_c = query.astype(compute_dtype)
    k_c = key.astype(compute_dtype)
    v_h = value.reshape(B, S, H, dk).transpose(0, 2, 1, 3).astype(compute_dtype)  # (B, H, S, dk)

    kernel = make_mha_kernel(dk, compute_dtype)

    out_bhsd = pl.pallas_call(
        kernel,
        out_shape=jax.ShapeDtypeStruct((B, H, S, dk), query.dtype),
        grid_spec=pltpu.PrefetchScalarGridSpec(
            num_scalar_prefetch=0,
            # Head outermost: the (D, dk) weight slice only changes every
            # B*QT steps, so it is DMA'd exactly H times total.
            grid=(H, B, QT),
            in_specs=[
                pl.BlockSpec((1, TQ, D), lambda h, b, qi: (b, qi, 0)),       # query tile
                pl.BlockSpec((1, S, D), lambda h, b, qi: (b, 0, 0)),         # full keys
                pl.BlockSpec((1, 1, S, dk), lambda h, b, qi: (b, h, 0, 0)),  # value head
                pl.BlockSpec((1, D, dk), lambda h, b, qi: (h, 0, 0)),        # Wq head slice
                pl.BlockSpec((1, 1, dk), lambda h, b, qi: (h, 0, 0)),        # bq head slice
                pl.BlockSpec((1, D, dk), lambda h, b, qi: (h, 0, 0)),        # Wk head slice
                pl.BlockSpec((1, 1, dk), lambda h, b, qi: (h, 0, 0)),        # bk head slice
            ],
            out_specs=pl.BlockSpec((1, 1, TQ, dk),
                                   lambda h, b, qi: (b, h, qi, 0)),
        ),
        compiler_params=pltpu.CompilerParams(
            dimension_semantics=("parallel", "parallel", "parallel"),
            vmem_limit_bytes=32 * 1024 * 1024,
        ),
    )(q_c, k_c, v_h, wq_h, bq_h, wk_h, bk_h)

    # (B, H, S, dk) -> (B, S, D): heads re-concatenated along features.
    return out_bhsd.transpose(0, 2, 1, 3).reshape(B, S, D)


def reference(query, key, value, wq, bq, wk, bk, attn_heads):
    B, S, D = query.shape
    dk = D // attn_heads
    Q = query @ wq.T + bq
    K = key @ wk.T + bk
    V = value
    Qh = Q.reshape(B, S, attn_heads, dk).transpose(0, 2, 1, 3)
    Kh = K.reshape(B, S, attn_heads, dk).transpose(0, 2, 1, 3)
    Vh = V.reshape(B, S, attn_heads, dk).transpose(0, 2, 1, 3)
    s = jnp.einsum("bhqd,bhkd->bhqk", Qh, Kh) / (dk ** 0.5)
    p = jax.nn.softmax(s, axis=-1)
    o = jnp.einsum("bhqk,bhkd->bhqd", p, Vh)
    return o.transpose(0, 2, 1, 3).reshape(B, S, D)


if __name__ == "__main__":
    B, S, d_model, attn_heads = 2, 8, 32, 4

    root = jax.random.PRNGKey(0)
    kq, kk, kv, kwq, kbq, kwk, kbk = jax.random.split(root, 7)

    query = jax.random.normal(kq, (B, S, d_model), dtype=jnp.float32)
    key = jax.random.normal(kk, (B, S, d_model), dtype=jnp.float32)
    value = jax.random.normal(kv, (B, S, d_model), dtype=jnp.float32)

    # PyTorch nn.Linear default init: U(-1/sqrt(fan_in), 1/sqrt(fan_in)).
    bound = 1.0 / (d_model ** 0.5)
    wq = jax.random.uniform(kwq, (d_model, d_model), jnp.float32, -bound, bound)
    bq = jax.random.uniform(kbq, (d_model,), jnp.float32, -bound, bound)
    wk = jax.random.uniform(kwk, (d_model, d_model), jnp.float32, -bound, bound)
    bk = jax.random.uniform(kbk, (d_model,), jnp.float32, -bound, bound)

    out = multi_head_attention(query, key, value, wq, bq, wk, bk, attn_heads)
    out = jax.block_until_ready(out)

    ref = reference(query, key, value, wq, bq, wk, bk, attn_heads)
    assert out.shape == (B, S, d_model)
    # bf16 MXU operands with f32 accumulation -> compare at bf16 tolerance.
    assert jnp.allclose(out, ref, atol=2e-2, rtol=2e-2), "mismatch vs JAX reference"

    print("KERNEL_OK")
</pallas_src>

<mosaic_0001>
module attributes {stable_mosaic.version = 11 : i64} {
  func.func @kernel(%arg0: i32, %arg1: i32, %arg2: i32, %arg3: memref<1x8x32xbf16, #tpu.memory_space<vmem>>, %arg4: memref<1x8x32xbf16, #tpu.memory_space<vmem>>, %arg5: memref<1x1x8x8xbf16, #tpu.memory_space<vmem>>, %arg6: memref<1x32x8xbf16, #tpu.memory_space<vmem>>, %arg7: memref<1x1x8xf32, #tpu.memory_space<vmem>>, %arg8: memref<1x32x8xbf16, #tpu.memory_space<vmem>>, %arg9: memref<1x1x8xf32, #tpu.memory_space<vmem>>, %arg10: memref<1x1x8x8xf32, #tpu.memory_space<vmem>>) attributes {dimension_semantics = [#tpu.dimension_semantics<parallel>, #tpu.dimension_semantics<parallel>, #tpu.dimension_semantics<parallel>], iteration_bounds = array<i64: 4, 2, 1>, scalar_prefetch = 0 : i64, scratch_operands = 0 : i64, tpu.core_type = #tpu.core_type<tc>, window_params = [{transform_indices = @transform_0, window_bounds = array<i64: 1, 8, 32>}, {transform_indices = @transform_1, window_bounds = array<i64: 1, 8, 32>}, {transform_indices = @transform_2, window_bounds = array<i64: 1, 1, 8, 8>}, {transform_indices = @transform_3, window_bounds = array<i64: 1, 32, 8>}, {transform_indices = @transform_4, window_bounds = array<i64: 1, 1, 8>}, {transform_indices = @transform_5, window_bounds = array<i64: 1, 32, 8>}, {transform_indices = @transform_6, window_bounds = array<i64: 1, 1, 8>}, {transform_indices = @transform_7, window_bounds = array<i64: 1, 1, 8, 8>}]} {
    %c0 = arith.constant 0 : index
    %c0_0 = arith.constant 0 : index
    %c0_1 = arith.constant 0 : index
    %0 = vector.load %arg3[%c0, %c0_0, %c0_1] : memref<1x8x32xbf16, #tpu.memory_space<vmem>>, vector<1x8x32xbf16>
    %1 = vector.shape_cast %0 : vector<1x8x32xbf16> to vector<8x32xbf16>
    %c0_2 = arith.constant 0 : index
    %c0_3 = arith.constant 0 : index
    %c0_4 = arith.constant 0 : index
    %2 = vector.load %arg4[%c0_2, %c0_3, %c0_4] : memref<1x8x32xbf16, #tpu.memory_space<vmem>>, vector<1x8x32xbf16>
    %3 = vector.shape_cast %2 : vector<1x8x32xbf16> to vector<8x32xbf16>
    %c0_5 = arith.constant 0 : index
    %c0_6 = arith.constant 0 : index
    %c0_7 = arith.constant 0 : index
    %c0_8 = arith.constant 0 : index
    %4 = vector.load %arg5[%c0_5, %c0_6, %c0_7, %c0_8] : memref<1x1x8x8xbf16, #tpu.memory_space<vmem>>, vector<1x1x8x8xbf16>
    %5 = vector.shape_cast %4 : vector<1x1x8x8xbf16> to vector<8x8xbf16>
    %c0_9 = arith.constant 0 : index
    %c0_10 = arith.constant 0 : index
    %c0_11 = arith.constant 0 : index
    %6 = vector.load %arg6[%c0_9, %c0_10, %c0_11] : memref<1x32x8xbf16, #tpu.memory_space<vmem>>, vector<1x32x8xbf16>
    %7 = vector.shape_cast %6 : vector<1x32x8xbf16> to vector<32x8xbf16>
    %c0_12 = arith.constant 0 : index
    %c0_13 = arith.constant 0 : index
    %c0_14 = arith.constant 0 : index
    %8 = vector.load %arg8[%c0_12, %c0_13, %c0_14] : memref<1x32x8xbf16, #tpu.memory_space<vmem>>, vector<1x32x8xbf16>
    %9 = vector.shape_cast %8 : vector<1x32x8xbf16> to vector<32x8xbf16>
    %c0_15 = arith.constant 0 : index
    %c0_16 = arith.constant 0 : index
    %c0_17 = arith.constant 0 : index
    %10 = vector.load %arg7[%c0_15, %c0_16, %c0_17] : memref<1x1x8xf32, #tpu.memory_space<vmem>>, vector<1x1x8xf32>
    %11 = vector.shape_cast %10 : vector<1x1x8xf32> to vector<1x8xf32>
    %c0_18 = arith.constant 0 : index
    %c0_19 = arith.constant 0 : index
    %c0_20 = arith.constant 0 : index
    %12 = vector.load %arg9[%c0_18, %c0_19, %c0_20] : memref<1x1x8xf32, #tpu.memory_space<vmem>>, vector<1x1x8xf32>
    %13 = vector.shape_cast %12 : vector<1x1x8xf32> to vector<1x8xf32>
    %cst = arith.constant dense<0.000000e+00> : vector<8x8xf32>
    %14 = tpu.matmul %1, %7, %cst {dimension_numbers = #tpu.dot_dimension_numbers<[1], [0], [0], [1], [0, 0, 1, 1], [], []>} : vector<8x32xbf16>, vector<32x8xbf16>, vector<8x8xf32> -> vector<8x8xf32>
    %15 = vector.broadcast %11 : vector<1x8xf32> to vector<8x8xf32>
    %16 = arith.addf %14, %15 : vector<8x8xf32>
    %cst_21 = arith.constant dense<0.000000e+00> : vector<8x8xf32>
    %17 = tpu.matmul %3, %9, %cst_21 {dimension_numbers = #tpu.dot_dimension_numbers<[1], [0], [0], [1], [0, 0, 1, 1], [], []>} : vector<8x32xbf16>, vector<32x8xbf16>, vector<8x8xf32> -> vector<8x8xf32>
    %18 = vector.broadcast %13 : vector<1x8xf32> to vector<8x8xf32>
    %19 = arith.addf %17, %18 : vector<8x8xf32>
    %cst_22 = arith.constant 0.353553385 : f32
    %20 = vector.broadcast %cst_22 : f32 to vector<8x8xf32>
    %21 = arith.mulf %16, %20 : vector<8x8xf32>
    %22 = arith.truncf %21 : vector<8x8xf32> to vector<8x8xbf16>
    %23 = arith.truncf %19 : vector<8x8xf32> to vector<8x8xbf16>
    %cst_23 = arith.constant dense<0.000000e+00> : vector<8x8xf32>
    %24 = tpu.matmul %22, %23, %cst_23 {dimension_numbers = #tpu.dot_dimension_numbers<[1], [1], [0], [0], [0, 0, 1, 0], [], []>} : vector<8x8xbf16>, vector<8x8xbf16>, vector<8x8xf32> -> vector<8x8xf32>
    %cst_24 = arith.constant dense<0xFF800000> : vector<8xf32>
    %25 = vector.multi_reduction <maximumf>, %24, %cst_24 [1] : vector<8x8xf32> to vector<8xf32>
    %26 = vector.shape_cast %25 : vector<8xf32> to vector<8x1xf32>
    %27 = vector.broadcast %26 : vector<8x1xf32> to vector<8x8xf32>
    %28 = arith.subf %24, %27 : vector<8x8xf32>
    %29 = math.exp %28 : vector<8x8xf32>
    %cst_25 = arith.constant dense<0.000000e+00> : vector<8xf32>
    %30 = vector.multi_reduction <add>, %29, %cst_25 [1] : vector<8x8xf32> to vector<8xf32>
    %31 = vector.shape_cast %30 : vector<8xf32> to vector<8x1xf32>
    %32 = tpu.reciprocal %31 {approx = true} : vector<8x1xf32> -> vector<8x1xf32>
    %33 = vector.broadcast %32 : vector<8x1xf32> to vector<8x8xf32>
    %34 = arith.mulf %29, %33 : vector<8x8xf32>
    %35 = arith.truncf %34 : vector<8x8xf32> to vector<8x8xbf16>
    %cst_26 = arith.constant dense<0.000000e+00> : vector<8x8xf32>
    %36 = tpu.matmul %35, %5, %cst_26 {dimension_numbers = #tpu.dot_dimension_numbers<[1], [0], [0], [1], [0, 0, 1, 1], [], []>} : vector<8x8xbf16>, vector<8x8xbf16>, vector<8x8xf32> -> vector<8x8xf32>
    %c0_27 = arith.constant 0 : index
    %c0_28 = arith.constant 0 : index
    %c0_29 = arith.constant 0 : index
    %c0_30 = arith.constant 0 : index
    %37 = vector.load %arg10[%c0_27, %c0_28, %c0_29, %c0_30] : memref<1x1x8x8xf32, #tpu.memory_space<vmem>>, vector<1x1x8x8xf32>
    %38 = vector.shape_cast %37 : vector<1x1x8x8xf32> to vector<8x8xf32>
    %39 = vector.shape_cast %36 : vector<8x8xf32> to vector<1x1x8x8xf32>
    tpu.vector_store %arg10[%c0_27, %c0_28, %c0_29, %c0_30], %39 {strides = array<i32>} : memref<1x1x8x8xf32, #tpu.memory_space<vmem>>, vector<1x1x8x8xf32>,
    return
  }
  func.func @transform_0(%arg0: i32, %arg1: i32, %arg2: i32) -> (i32, i32, i32) {
    %c0_i32 = arith.constant 0 : i32
    %c0_i32_0 = arith.constant 0 : i32
    return %arg1, %arg2, %c0_i32 : i32, i32, i32
  }
  func.func @transform_1(%arg0: i32, %arg1: i32, %arg2: i32) -> (i32, i32, i32) {
    %c0_i32 = arith.constant 0 : i32
    %c0_i32_0 = arith.constant 0 : i32
    %c0_i32_1 = arith.constant 0 : i32
    return %arg1, %c0_i32, %c0_i32_0 : i32, i32, i32
  }
  func.func @transform_2(%arg0: i32, %arg1: i32, %arg2: i32) -> (i32, i32, i32, i32) {
    %c0_i32 = arith.constant 0 : i32
    %c0_i32_0 = arith.constant 0 : i32
    %c0_i32_1 = arith.constant 0 : i32
    return %arg1, %arg0, %c0_i32, %c0_i32_0 : i32, i32, i32, i32
  }
  func.func @transform_3(%arg0: i32, %arg1: i32, %arg2: i32) -> (i32, i32, i32) {
    %c0_i32 = arith.constant 0 : i32
    %c0_i32_0 = arith.constant 0 : i32
    %c0_i32_1 = arith.constant 0 : i32
    return %arg0, %c0_i32, %c0_i32_0 : i32, i32, i32
  }
  func.func @transform_4(%arg0: i32, %arg1: i32, %arg2: i32) -> (i32, i32, i32) {
    %c0_i32 = arith.constant 0 : i32
    %c0_i32_0 = arith.constant 0 : i32
    %c0_i32_1 = arith.constant 0 : i32
    return %arg0, %c0_i32, %c0_i32_0 : i32, i32, i32
  }
  func.func @transform_5(%arg0: i32, %arg1: i32, %arg2: i32) -> (i32, i32, i32) {
    %c0_i32 = arith.constant 0 : i32
    %c0_i32_0 = arith.constant 0 : i32
    %c0_i32_1 = arith.constant 0 : i32
    return %arg0, %c0_i32, %c0_i32_0 : i32, i32, i32
  }
  func.func @transform_6(%arg0: i32, %arg1: i32, %arg2: i32) -> (i32, i32, i32) {
    %c0_i32 = arith.constant 0 : i32
    %c0_i32_0 = arith.constant 0 : i32
    %c0_i32_1 = arith.constant 0 : i32
    return %arg0, %c0_i32, %c0_i32_0 : i32, i32, i32
  }
  func.func @transform_7(%arg0: i32, %arg1: i32, %arg2: i32) -> (i32, i32, i32, i32) {
    %c0_i32 = arith.constant 0 : i32
    %c0_i32_0 = arith.constant 0 : i32
    return %arg1, %arg0, %arg2, %c0_i32 : i32, i32, i32, i32
  }
}

</mosaic_0001>

<llo_original>
// kernel: tpu_custom_call.1
$region0: #{tpu_custom_call.1}
  #allocation0 [shape = 'u32[]', space=smem, size = 0x4, offset = 0x4, fixed_abs, tag = 'smem constant byte address 0x4 - core index']
  #allocation1 [shape = 'u32[72,128]{1,0:T(1,128)}', space=vmem, size = 0x9000, scoped, tag = 'internal scratch']
  %s0 = inlined_call_operand.vmem [shape: bf16[2,8,32], index: 0, kind: input, shape index: {}]
  %s1 = inlined_call_operand.vmem [shape: bf16[2,8,32], index: 1, kind: input, shape index: {}]
  %s2 = inlined_call_operand.vmem [shape: bf16[2,4,8,8], index: 2, kind: input, shape index: {}]
  %s3 = inlined_call_operand.vmem [shape: bf16[4,32,8], index: 3, kind: input, shape index: {}]
  %s4 = inlined_call_operand.vmem [shape: f32[4,1,8], index: 4, kind: input, shape index: {}]
  %s5 = inlined_call_operand.vmem [shape: bf16[4,32,8], index: 5, kind: input, shape index: {}]
  %s6 = inlined_call_operand.vmem [shape: f32[4,1,8], index: 6, kind: input, shape index: {}]
  %s7 = inlined_call_operand.hbm [shape: f32[2,4,8,8], index: 7, kind: output, shape index: {}]
  %s8 = sld [smem:[#allocation0]]
  $region61: #{tpu_custom_call.1} parent=0
    _
  %s10 = ssub.s32 1, %s8
  %s11 = scalar_select 0, %s10, %s8
  $region1: #{tpu_custom_call.1} parent=0
    #allocation2 [shape = 'u8[8192]{0}', space=vmem, size = 0x2000, scoped, tag = 'output window, operand 0']
    #allocation3 [shape = 's32[2]{0}', space=sflag, size = 0x8, scoped, tag = 'scoped memory for tpu_custom_call.1']
    %12 = vsyncpa [#allocation3], 0
    %s13 = scalar_lea.sflag [#allocation3], 1
    %14 = vsyncpa %s13, 0
    loop: start=0, step=1, limit=10
    $region2: #{tpu_custom_call.1} parent=1 // loop_pre_header
      _
    $region3: #{tpu_custom_call.1} parent=1 // loop_header
      %s16 = sphi 0, %s20
      %p17 = scmp.ge.s32.totalorder %s16, 10
      %s23 = sphi 0, %s42
      %s24 = sphi 0, %s38
      %s25 = sphi 0, %s34
      %s26 = sphi 0, %s23
      %s27 = sphi 0, %s24
      %s28 = sphi 0, %s25
      %s29 = sphi 0, %s26
      %s30 = sphi 0, %s27
      %s31 = sphi 0, %s28
      %s47 = sphi 0, %s49
      %s50 = sphi 0, %s47
      %s51 = sphi 0, %s50
      %s67 = sphi 0, %s51
      %s73 = sphi 0, %s75
      %s76 = sphi 0, %s73
      %s77 = sphi 0, %s76
      %s93 = sphi 0, %s77
      %s101 = sphi 0, %s103
      %s104 = sphi 0, %s101
      %s105 = sphi 0, %s104
      %s121 = sphi 0, %s105
      %s127 = sphi 0, %s129
      %s130 = sphi 0, %s127
      %s131 = sphi 0, %s130
      %s147 = sphi 0, %s131
      %s153 = sphi 0, %s155
      %s156 = sphi 0, %s153
      %s157 = sphi 0, %s156
      %s173 = sphi 0, %s157
      %s179 = sphi 0, %s181
      %s182 = sphi 0, %s179
      %s183 = sphi 0, %s182
      %s199 = sphi 0, %s183
      %s205 = sphi 0, %s207
      %s208 = sphi 0, %s205
      %s209 = sphi 0, %s208
      %s225 = sphi 0, %s209
      %s235 = sphi 0, %s237
      %s238 = sphi 0, %s235
      %s239 = sphi 0, %s238
      %s255 = sphi 0, %s239
    $region4: #{tpu_custom_call.1} parent=1 // loop_header_branch
      %19 = sbr.rel (%p17) target = $region8
    $region5: #{tpu_custom_call.1} parent=1 // loop_body
      %s21 = ssub.s32 %s16, 1
      %s22 = ssub.s32 %s16, 2
      %s32 = sadd.s32 1, %s25
      %p33 = scmp.ge.s32.totalorder %s32, 1
      %s34 = scalar_select %p33, 0, %s32
      %s35 = sadd.s32 1, %s24
      %s36 = scalar_select %p33, %s35, %s24
      %p37 = scmp.ge.s32.totalorder %s36, 2
      %s38 = scalar_select %p37, 0, %s36
      %s39 = sadd.s32 1, %s23
      %s40 = scalar_select %p37, %s39, %s23
      %p41 = scmp.ge.s32.totalorder %s40, 4
      %s42 = scalar_select %p41, 0, %s40
      %s43 = ssub.s32 %s24, %s38
      %s44 = ssub.s32 %s25, %s34
      %s45 = sor.u32 %s43, %s44
      %p46 = scmp.eq.s32.totalorder %s45, 0
      %s48 = sadd.s32 %s47, 1
      %s49 = scalar_select %p46, %s47, %s48
      %p52 = pneg %p46
      %p53 = scmp.eq.s32.totalorder %s16, 7
      %p54 = por %p52, %p53
      %p55 = scmp.ne.s32.totalorder %s47, %s50
      %p56 = scmp.eq.s32.totalorder %s16, 0
      %p57 = por %p55, %p56
      %p58 = scmp.ne.s32.totalorder %s47, %s50
      %p59 = scmp.eq.s32.totalorder %s21, 7
      %p60 = por %p58, %p59
      %p61 = scmp.ne.s32.totalorder %s50, %s51
      %p62 = scmp.eq.s32.totalorder %s21, 0
      %p63 = por %p61, %p62
      %p64 = scmp.ne.s32.totalorder %s50, %s51
      %p65 = scmp.eq.s32.totalorder %s22, 7
      %p66 = por %p64, %p65
      %p68 = scmp.ne.s32.totalorder %s51, %s67
      %p69 = scmp.eq.s32.totalorder %s22, 0
      %p70 = por %p68, %p69
      %s71 = ssub.s32 %s24, %s38
      %p72 = scmp.eq.s32.totalorder %s71, 0
      %s74 = sadd.s32 %s73, 1
      %s75 = scalar_select %p72, %s73, %s74
      %p78 = pneg %p72
      %p79 = scmp.eq.s32.totalorder %s16, 7
      %p80 = por %p78, %p79
      %p81 = scmp.ne.s32.totalorder %s73, %s76
      %p82 = scmp.eq.s32.totalorder %s16, 0
      %p83 = por %p81, %p82
      %p84 = scmp.ne.s32.totalorder %s73, %s76
      %p85 = scmp.eq.s32.totalorder %s21, 7
      %p86 = por %p84, %p85
      %p87 = scmp.ne.s32.totalorder %s76, %s77
      %p88 = scmp.eq.s32.totalorder %s21, 0
      %p89 = por %p87, %p88
      %p90 = scmp.ne.s32.totalorder %s76, %s77
      %p91 = scmp.eq.s32.totalorder %s22, 7
      %p92 = por %p90, %p91
      %p94 = scmp.ne.s32.totalorder %s77, %s93
      %p95 = scmp.eq.s32.totalorder %s22, 0
      %p96 = por %p94, %p95
      %s97 = ssub.s32 %s24, %s38
      %s98 = ssub.s32 %s23, %s42
      %s99 = sor.u32 %s97, %s98
      %p100 = scmp.eq.s32.totalorder %s99, 0
      %s102 = sadd.s32 %s101, 1
      %s103 = scalar_select %p100, %s101, %s102
      %p106 = pneg %p100
      %p107 = scmp.eq.s32.totalorder %s16, 7
      %p108 = por %p106, %p107
      %p109 = scmp.ne.s32.totalorder %s101, %s104
      %p110 = scmp.eq.s32.totalorder %s16, 0
      %p111 = por %p109, %p110
      %p112 = scmp.ne.s32.totalorder %s101, %s104
      %p113 = scmp.eq.s32.totalorder %s21, 7
      %p114 = por %p112, %p113
      %p115 = scmp.ne.s32.totalorder %s104, %s105
      %p116 = scmp.eq.s32.totalorder %s21, 0
      %p117 = por %p115, %p116
      %p118 = scmp.ne.s32.totalorder %s104, %s105
      %p119 = scmp.eq.s32.totalorder %s22, 7
      %p120 = por %p118, %p119
      %p122 = scmp.ne.s32.totalorder %s105, %s121
      %p123 = scmp.eq.s32.totalorder %s22, 0
      %p124 = por %p122, %p123
      %s125 = ssub.s32 %s23, %s42
      %p126 = scmp.eq.s32.totalorder %s125, 0
      %s128 = sadd.s32 %s127, 1
      %s129 = scalar_select %p126, %s127, %s128
      %p132 = pneg %p126
      %p133 = scmp.eq.s32.totalorder %s16, 7
      %p134 = por %p132, %p133
      %p135 = scmp.ne.s32.totalorder %s127, %s130
      %p136 = scmp.eq.s32.totalorder %s16, 0
      %p137 = por %p135, %p136
      %p138 = scmp.ne.s32.totalorder %s127, %s130
      %p139 = scmp.eq.s32.totalorder %s21, 7
      %p140 = por %p138, %p139
      %p141 = scmp.ne.s32.totalorder %s130, %s131
      %p142 = scmp.eq.s32.totalorder %s21, 0
      %p143 = por %p141, %p142
      %p144 = scmp.ne.s32.totalorder %s130, %s131
      %p145 = scmp.eq.s32.totalorder %s22, 7
      %p146 = por %p144, %p145
      %p148 = scmp.ne.s32.totalorder %s131, %s147
      %p149 = scmp.eq.s32.totalorder %s22, 0
      %p150 = por %p148, %p149
      %s151 = ssub.s32 %s23, %s42
      %p152 = scmp.eq.s32.totalorder %s151, 0
      %s154 = sadd.s32 %s153, 1
      %s155 = scalar_select %p152, %s153, %s154
      %p158 = pneg %p152
      %p159 = scmp.eq.s32.totalorder %s16, 7
      %p160 = por %p158, %p159
      %p161 = scmp.ne.s32.totalorder %s153, %s156
      %p162 = scmp.eq.s32.totalorder %s16, 0
      %p163 = por %p161, %p162
      %p164 = scmp.ne.s32.totalorder %s153, %s156
      %p165 = scmp.eq.s32.totalorder %s21, 7
      %p166 = por %p164, %p165
      %p167 = scmp.ne.s32.totalorder %s156, %s157
      %p168 = scmp.eq.s32.totalorder %s21, 0
      %p169 = por %p167, %p168
      %p170 = scmp.ne.s32.totalorder %s156, %s157
      %p171 = scmp.eq.s32.totalorder %s22, 7
      %p172 = por %p170, %p171
      %p174 = scmp.ne.s32.totalorder %s157, %s173
      %p175 = scmp.eq.s32.totalorder %s22, 0
      %p176 = por %p174, %p175
      %s177 = ssub.s32 %s23, %s42
      %p178 = scmp.eq.s32.totalorder %s177, 0
      %s180 = sadd.s32 %s179, 1
      %s181 = scalar_select %p178, %s179, %s180
      %p184 = pneg %p178
      %p185 = scmp.eq.s32.totalorder %s16, 7
      %p186 = por %p184, %p185
      %p187 = scmp.ne.s32.totalorder %s179, %s182
      %p188 = scmp.eq.s32.totalorder %s16, 0
      %p189 = por %p187, %p188
      %p190 = scmp.ne.s32.totalorder %s179, %s182
      %p191 = scmp.eq.s32.totalorder %s21, 7
      %p192 = por %p190, %p191
      %p193 = scmp.ne.s32.totalorder %s182, %s183
      %p194 = scmp.eq.s32.totalorder %s21, 0
      %p195 = por %p193, %p194
      %p196 = scmp.ne.s32.totalorder %s182, %s183
      %p197 = scmp.eq.s32.totalorder %s22, 7
      %p198 = por %p196, %p197
      %p200 = scmp.ne.s32.totalorder %s183, %s199
      %p201 = scmp.eq.s32.totalorder %s22, 0
      %p202 = por %p200, %p201
      %s203 = ssub.s32 %s23, %s42
      %p204 = scmp.eq.s32.totalorder %s203, 0
      %s206 = sadd.s32 %s205, 1
      %s207 = scalar_select %p204, %s205, %s206
      %p210 = pneg %p204
      %p211 = scmp.eq.s32.totalorder %s16, 7
      %p212 = por %p210, %p211
      %p213 = scmp.ne.s32.totalorder %s205, %s208
      %p214 = scmp.eq.s32.totalorder %s16, 0
      %p215 = por %p213, %p214
      %p216 = scmp.ne.s32.totalorder %s205, %s208
      %p217 = scmp.eq.s32.totalorder %s21, 7
      %p218 = por %p216, %p217
      %p219 = scmp.ne.s32.totalorder %s208, %s209
      %p220 = scmp.eq.s32.totalorder %s21, 0
      %p221 = por %p219, %p220
      %p222 = scmp.ne.s32.totalorder %s208, %s209
      %p223 = scmp.eq.s32.totalorder %s22, 7
      %p224 = por %p222, %p223
      %p226 = scmp.ne.s32.totalorder %s209, %s225
      %p227 = scmp.eq.s32.totalorder %s22, 0
      %p228 = por %p226, %p227
      %s229 = ssub.s32 %s24, %s38
      %s230 = ssub.s32 %s23, %s42
      %s231 = sor.u32 %s229, %s230
      %s232 = ssub.s32 %s25, %s34
      %s233 = sor.u32 %s231, %s232
      %p234 = scmp.eq.s32.totalorder %s233, 0
      %s236 = sadd.s32 %s235, 1
      %s237 = scalar_select %p234, %s235, %s236
      %p240 = pneg %p234
      %p241 = scmp.eq.s32.totalorder %s16, 7
      %p242 = por %p240, %p241
      %p243 = scmp.ne.s32.totalorder %s235, %s238
      %p244 = scmp.eq.s32.totalorder %s16, 0
      %p245 = por %p243, %p244
      %p246 = scmp.ne.s32.totalorder %s235, %s238
      %p247 = scmp.eq.s32.totalorder %s21, 7
      %p248 = por %p246, %p247
      %p249 = scmp.ne.s32.totalorder %s238, %s239
      %p250 = scmp.eq.s32.totalorder %s21, 0
      %p251 = por %p249, %p250
      %p252 = scmp.ne.s32.totalorder %s238, %s239
      %p253 = scmp.eq.s32.totalorder %s22, 7
      %p254 = por %p252, %p253
      %p256 = scmp.ne.s32.totalorder %s239, %s255
      %p257 = scmp.eq.s32.totalorder %s22, 0
      %p258 = por %p256, %p257
      %p259 = scmp.le.s32.totalorder 1, %s16
      %p260 = scmp.lt.s32.totalorder %s16, 9
      %p261 = pnand %p259, %p260
      %p262 = pneg %p261
      // Predicated region
      $region9: #{tpu_custom_call.1} parent=5 // pred_check
        _
      $region10: #{tpu_custom_call.1} parent=5 // pred_check_branch
        %264 = sbr.rel (%p261) target = $region12
      $region11: #{tpu_custom_call.1} parent=5 // pred_region
        %s265 = ssub.s32 %s16, 1
      $region12: #{tpu_custom_call.1} parent=5 // pred_fallthru
        _
      %p266 = scmp.lt.s32.totalorder %s16, 8
      // Predicated region
      $region13: #{tpu_custom_call.1} parent=5 // pred_check
        %p267 = pneg %p266
      $region14: #{tpu_custom_call.1} parent=5 // pred_check_branch
        %269 = sbr.rel (%p267) target = $region16
      $region15: #{tpu_custom_call.1} parent=5 // pred_region
        // Predicated region
        $region17: #{tpu_custom_call.1} parent=15 // pred_check
          %p270 = pneg %p57
        $region18: #{tpu_custom_call.1} parent=15 // pred_check_branch
          %272 = sbr.rel (%p270) target = $region20
        $region19: #{tpu_custom_call.1} parent=15 // pred_region
          %p273 = scmp.lt.s32.totalorder %s24, 1
          %s274 = scalar_select %p273, %s24, 1
          %p275 = scmp.lt.s32.totalorder %s25, 0
          %s276 = scalar_select %p275, %s25, 0
          %s277 = sadd.s32 %s276, %s274
          %s278 = smul.addr %s277, 4
          %s279 = scalar_lea.vmem %s0, %s278
        $region20: #{tpu_custom_call.1} parent=15 // pred_fallthru
          _
        // Predicated region
        $region21: #{tpu_custom_call.1} parent=15 // pred_check
          %p280 = pneg %p83
        $region22: #{tpu_custom_call.1} parent=15 // pred_check_branch
          %282 = sbr.rel (%p280) target = $region24
        $region23: #{tpu_custom_call.1} parent=15 // pred_region
          %p283 = scmp.lt.s32.totalorder %s24, 1
          %s284 = scalar_select %p283, %s24, 1
          %s285 = smul.addr %s284, 4
          %s286 = scalar_lea.vmem %s1, %s285
        $region24: #{tpu_custom_call.1} parent=15 // pred_fallthru
          _
        // Predicated region
        $region25: #{tpu_custom_call.1} parent=15 // pred_check
          %p287 = pneg %p111
        $region26: #{tpu_custom_call.1} parent=15 // pred_check_branch
          %289 = sbr.rel (%p287) target = $region28
        $region27: #{tpu_custom_call.1} parent=15 // pred_region
          %p290 = scmp.lt.s32.totalorder %s24, 1
          %s291 = scalar_select %p290, %s24, 1
          %p292 = scmp.lt.s32.totalorder %s23, 3
          %s293 = scalar_select %p292, %s23, 3
          %s294 = smul.addr %s291, 4
          %s295 = sadd.s32 %s293, %s294
          %s296 = smul.addr %s295, 4
          %s297 = scalar_lea.vmem %s2, %s296
        $region28: #{tpu_custom_call.1} parent=15 // pred_fallthru
          _
        // Predicated region
        $region29: #{tpu_custom_call.1} parent=15 // pred_check
          %p298 = pneg %p137
        $region30: #{tpu_custom_call.1} parent=15 // pred_check_branch
          %300 = sbr.rel (%p298) target = $region32
        $region31: #{tpu_custom_call.1} parent=15 // pred_region
          %p301 = scmp.lt.s32.totalorder %s23, 3
          %s302 = scalar_select %p301, %s23, 3
          %s303 = smul.addr %s302, 4
          %s304 = smul.addr %s303, 4
          %s305 = scalar_lea.vmem %s3, %s304
        $region32: #{tpu_custom_call.1} parent=15 // pred_fallthru
          _
        // Predicated region
        $region33: #{tpu_custom_call.1} parent=15 // pred_check
          %p306 = pneg %p163
        $region34: #{tpu_custom_call.1} parent=15 // pred_check_branch
          %308 = sbr.rel (%p306) target = $region36
        $region35: #{tpu_custom_call.1} parent=15 // pred_region
          %p309 = scmp.lt.s32.totalorder %s23, 3
          %s310 = scalar_select %p309, %s23, 3
          %s311 = scalar_lea.vmem %s4, %s310
        $region36: #{tpu_custom_call.1} parent=15 // pred_fallthru
          _
        // Predicated region
        $region37: #{tpu_custom_call.1} parent=15 // pred_check
          %p312 = pneg %p189
        $region38: #{tpu_custom_call.1} parent=15 // pred_check_branch
          %314 = sbr.rel (%p312) target = $region40
        $region39: #{tpu_custom_call.1} parent=15 // pred_region
          %p315 = scmp.lt.s32.totalorder %s23, 3
          %s316 = scalar_select %p315, %s23, 3
          %s317 = smul.addr %s316, 4
          %s318 = smul.addr %s317, 4
          %s319 = scalar_lea.vmem %s5, %s318
        $region40: #{tpu_custom_call.1} parent=15 // pred_fallthru
          _
        // Predicated region
        $region41: #{tpu_custom_call.1} parent=15 // pred_check
          %p320 = pneg %p215
        $region42: #{tpu_custom_call.1} parent=15 // pred_check_branch
          %322 = sbr.rel (%p320) target = $region44
        $region43: #{tpu_custom_call.1} parent=15 // pred_region
          %p323 = scmp.lt.s32.totalorder %s23, 3
          %s324 = scalar_select %p323, %s23, 3
          %s325 = scalar_lea.vmem %s6, %s324
        $region44: #{tpu_custom_call.1} parent=15 // pred_fallthru
          _
      $region16: #{tpu_custom_call.1} parent=5 // pred_fallthru
        _
      %p326 = scmp.le.s32.totalorder 1, %s16
      %p327 = scmp.lt.s32.totalorder %s16, 9
      %p328 = pnand %p326, %p327
      %p329 = pneg %p328
      // Predicated region
      $region45: #{tpu_custom_call.1} parent=5 // pred_check
        _
      $region46: #{tpu_custom_call.1} parent=5 // pred_check_branch
        %331 = sbr.rel (%p328) target = $region48
      $region47: #{tpu_custom_call.1} parent=5 // pred_region
        %s332 = ssub.s32 %s16, 1
        %p333 = scmp.lt.s32.totalorder %s27, 1
        %s334 = scalar_select %p333, %s27, 1
        %p335 = scmp.lt.s32.totalorder %s28, 0
        %s336 = scalar_select %p335, %s28, 0
        %s337 = sadd.s32 %s336, %s334
        %s338 = smul.addr %s337, 4
        %s339 = scalar_lea.vmem %s0, %s338
        %p340 = pneg %p63
        %p341 = pneg %p60
        %p342 = scmp.lt.s32.totalorder %s27, 1
        %s343 = scalar_select %p342, %s27, 1
        %s344 = smul.addr %s343, 4
        %s345 = scalar_lea.vmem %s1, %s344
        %p346 = pneg %p89
        %p347 = pneg %p86
        %p348 = scmp.lt.s32.totalorder %s27, 1
        %s349 = scalar_select %p348, %s27, 1
        %p350 = scmp.lt.s32.totalorder %s26, 3
        %s351 = scalar_select %p350, %s26, 3
        %s352 = smul.addr %s349, 4
        %s353 = sadd.s32 %s351, %s352
        %s354 = smul.addr %s353, 4
        %s355 = scalar_lea.vmem %s2, %s354
        %p356 = pneg %p117
        %p357 = pneg %p114
        %p358 = scmp.lt.s32.totalorder %s26, 3
        %s359 = scalar_select %p358, %s26, 3
        %s360 = smul.addr %s359, 4
        %s361 = smul.addr %s360, 4
        %s362 = scalar_lea.vmem %s3, %s361
        %p363 = pneg %p143
        %p364 = pneg %p140
        %p365 = scmp.lt.s32.totalorder %s26, 3
        %s366 = scalar_select %p365, %s26, 3
        %s367 = scalar_lea.vmem %s4, %s366
        %p368 = pneg %p169
        %p369 = pneg %p166
        %p370 = scmp.lt.s32.totalorder %s26, 3
        %s371 = scalar_select %p370, %s26, 3
        %s372 = smul.addr %s371, 4
        %s373 = smul.addr %s372, 4
        %s374 = scalar_lea.vmem %s5, %s373
        %p375 = pneg %p195
        %p376 = pneg %p192
        %p377 = scmp.lt.s32.totalorder %s26, 3
        %s378 = scalar_select %p377, %s26, 3
        %s379 = scalar_lea.vmem %s6, %s378
        %p380 = pneg %p221
        %p381 = pneg %p218
        %p382 = pneg %p251
        %p383 = pneg %p248
        %s384 = sand.u32 %s238, 1
        %s385 = scalar_lea.sflag [#allocation3], %s384
        %s386 = sand.u32 %s238, 1
        %s387 = smul.addr %s386, 8
        %s388 = scalar_lea.vmem [#allocation2], %s387
        %p389 = scmp.lt.s32.totalorder %s27, 1
        %s390 = scalar_select %p389, %s27, 1
        %p391 = scmp.lt.s32.totalorder %s28, 0
        %s392 = scalar_select %p391, %s28, 0
        %s393 = sadd.s32 %s392, %s390
        %s394 = smul.addr %s393, 4
        %s395 = scalar_lea.vmem %s0, %s394
        %p396 = scmp.lt.s32.totalorder %s27, 1
        %s397 = scalar_select %p396, %s27, 1
        %s398 = smul.addr %s397, 4
        %s399 = scalar_lea.vmem %s1, %s398
        %p400 = scmp.lt.s32.totalorder %s27, 1
        %s401 = scalar_select %p400, %s27, 1
        %p402 = scmp.lt.s32.totalorder %s26, 3
        %s403 = scalar_select %p402, %s26, 3
        %s404 = smul.addr %s401, 4
        %s405 = sadd.s32 %s403, %s404
        %s406 = smul.addr %s405, 4
        %s407 = scalar_lea.vmem %s2, %s406
        %p408 = scmp.lt.s32.totalorder %s26, 3
        %s409 = scalar_select %p408, %s26, 3
        %s410 = smul.addr %s409, 4
        %s411 = smul.addr %s410, 4
        %s412 = scalar_lea.vmem %s3, %s411
        %p413 = scmp.lt.s32.totalorder %s26, 3
        %s414 = scalar_select %p413, %s26, 3
        %s415 = scalar_lea.vmem %s4, %s414
        %p416 = scmp.lt.s32.totalorder %s26, 3
        %s417 = scalar_select %p416, %s26, 3
        %s418 = smul.addr %s417, 4
        %s419 = smul.addr %s418, 4
        %s420 = scalar_lea.vmem %s5, %s419
        %p421 = scmp.lt.s32.totalorder %s26, 3
        %s422 = scalar_select %p421, %s26, 3
        %s423 = scalar_lea.vmem %s6, %s422
        %v425 = vld [vmem:[%s395] sm:$0xf]
        %v426 = vld [vmem:[%s399] sm:$0xf]
        %v427 = vld [vmem:[%s407] sm:$0xf]
        %v428 = vld [vmem:[%s412] sm:$0xf]
        %v429 = vld [vmem:[%s412 + $0x4] sm:$0xf]
        %v430 = vld [vmem:[%s412 + $0x8] sm:$0xf]
        %v431 = vld [vmem:[%s412 + $0xc] sm:$0xf]
        %v432 = vld [vmem:[%s420] sm:$0xf]
        %v433 = vld [vmem:[%s420 + $0x4] sm:$0xf]
        %v434 = vld [vmem:[%s420 + $0x8] sm:$0xf]
        %v435 = vld [vmem:[%s420 + $0xc] sm:$0xf]
        %v436 = vld [vmem:[%s415] sm:$0x1]
        %v437 = vld [vmem:[%s423] sm:$0x1]
        %v439 = vperm.slane %v436, 0
        %v445 = vunpack.c.l.b16 %v428
        %v446 = vunpack.c.l.b16 %v429
        %v447 = vunpack.c.l.b16 %v430
        %v448 = vunpack.c.l.b16 %v431
        %v449 = vpack.c.b16 %v446, %v445
        %v450 = vpack.c.b16 %v448, %v447
        %vm453 = vcmask 261120
        %v455 = vsel %vm453, %v425, 0
        %457 = vmatpush.bf16.msra.mxu0 0
        %458 = vmatpush.bf16.msra.mxu0 0
        %459 = vmatpush.bf16.msra.mxu0 0
        %460 = vmatpush.bf16.msra.mxu0 0
        %461 = vmatpush.bf16.msra.mxu0 0
        %462 = vmatpush.bf16.msra.mxu0 0
        %463 = vmatpush.bf16.msra.mxu0 %v450
        %464 = vmatpush.bf16.msra.mxu0 %v449
        %465 = vmatmul.bf16.gmra.mxu0 %v455
        %v466 = vpop.f32.mrf.mxu0
        %v467 = vadd.f32 %v439, %v466
        %v468 = vpop.f32.mrf.mxu0
        %469 = vdwg.mxu0
        %v471 = vperm.slane %v437, 0
        %v477 = vunpack.c.l.b16 %v432
        %v478 = vunpack.c.l.b16 %v433
        %v479 = vunpack.c.l.b16 %v434
        %v480 = vunpack.c.l.b16 %v435
        %v481 = vpack.c.b16 %v478, %v477
        %v482 = vpack.c.b16 %v480, %v479
        %v486 = vsel %vm453, %v426, 0
        %488 = vmatpush.bf16.msra.mxu0 0
        %489 = vmatpush.bf16.msra.mxu0 0
        %490 = vmatpush.bf16.msra.mxu0 0
        %491 = vmatpush.bf16.msra.mxu0 0
        %492 = vmatpush.bf16.msra.mxu0 0
        %493 = vmatpush.bf16.msra.mxu0 0
        %494 = vmatpush.bf16.msra.mxu0 %v482
        %495 = vmatpush.bf16.msra.mxu0 %v481
        %496 = vmatmul.bf16.gmra.mxu0 %v486
        %v497 = vpop.f32.mrf.mxu0
        %v498 = vadd.f32 %v471, %v497
        %v499 = vpop.f32.mrf.mxu0
        %500 = vdwg.mxu0
        %v501 = vmul.f32 %v467, 0.35355338
        %v502 = vpack.c.bf16 %v501, %v501
        %v503 = vpack.c.bf16 %v498, %v498
        %vm504 = vcmask 64512
        %v506 = vsel %vm504, %v502, 0
        %v509 = vsel %vm504, %v503, 0
        %511 = vmatpush.bf16.xpose.msra.mxu0 0
        %512 = vmatpush.bf16.xpose.msra.mxu0 0
        %513 = vmatpush.bf16.xpose.msra.mxu0 0
        %514 = vmatpush.bf16.xpose.msra.mxu0 0
        %515 = vmatpush.bf16.xpose.msra.mxu0 0
        %516 = vmatpush.bf16.xpose.msra.mxu0 0
        %517 = vmatpush.bf16.xpose.msra.mxu0 0
        %518 = vmatpush.bf16.xpose.msra.mxu0 %v509
        %519 = vmatmul.bf16.gmra.mxu0 %v506
        %v520 = vpop.f32.mrf.mxu0
        %v521 = vadd.f32 0.0, %v520
        %v522 = vpop.f32.mrf.mxu0
        %523 = vdwg.mxu0
        %v524 = vsel %vm504, %v521, -inf
        %525 = vmax.xlane.f32.xlu0 %v524
        %v526 = vpop.xlane.xlu0 %525
        %v527 = vsub.f32 %v521, %v526
        %v528 = vmul.f32 %v527, 1.442695
        %v529 = vpow.pop %v528
        %v530 = vsel %vm504, %v529, 0.0
        %531 = vadd.xlane.f32.xlu0 %v530
        %v532 = vpop.xlane.xlu0 %531
        %v533 = vrcp.pop %v532
        %v534 = vmul.f32 %v529, %v533
        %v535 = vpack.c.bf16 %v534, %v534
        %v537 = vsel %vm504, %v535, 0
        %vm539 = vcmask 1043456
        %v541 = vsel %vm539, %v427, 0
        %543 = vmatpush.bf16.msra.mxu0 0
        %544 = vmatpush.bf16.msra.mxu0 0
        %545 = vmatpush.bf16.msra.mxu0 0
        %546 = vmatpush.bf16.msra.mxu0 0
        %547 = vmatpush.bf16.msra.mxu0 0
        %548 = vmatpush.bf16.msra.mxu0 0
        %549 = vmatpush.bf16.msra.mxu0 0
        %550 = vmatpush.bf16.msra.mxu0 %v541
        %551 = vmatmul.bf16.gmra.mxu0 %v537
        %v552 = vpop.f32.mrf.mxu0
        %v553 = vadd.f32 0.0, %v552
        %v554 = vpop.f32.mrf.mxu0
        %555 = vdwg.mxu0
        %556 = vst.msk [vmem:[%s388] sm:$0xff] %vm504, %v553
        %s557 = sand.u32 %s238, 1
        %s558 = scalar_lea.sflag [#allocation3], %s557
        %s559 = sand.u32 %s238, 1
        %s560 = smul.addr %s559, 8
        %s561 = scalar_lea.vmem [#allocation2], %s560
        // Predicated region
        $region49: #{tpu_custom_call.1} parent=47 // pred_check
          %p562 = pneg %p248
        $region50: #{tpu_custom_call.1} parent=47 // pred_check_branch
          %564 = sbr.rel (%p562) target = $region52
        $region51: #{tpu_custom_call.1} parent=47 // pred_region
          %566 = vsyncadd %s558, 0
          %s567 = sadd.s32 %s28, %s26
          %s568 = smul.addr %s27, 4
          %s569 = sadd.s32 %s567, %s568
          %s570 = smul.addr %s569, 8
          %s571 = scalar_lea.hbm %s7, %s570
          %s573 = sshll.u32 %s561, 4
          %s574 = int_to_ptr.vmem [resolvable:$true] %s573
          %s575 = sshll.u32 %s571, 4
          %s576 = int_to_ptr.hbm [resolvable:$true] %s575
          %578 = dma.vmem_to_hbm [thread:$0]  %s574, 128, %s576, %s558
        $region52: #{tpu_custom_call.1} parent=47 // pred_fallthru
          _
      $region48: #{tpu_custom_call.1} parent=5 // pred_fallthru
        _
      %p579 = scmp.le.s32.totalorder 2, %s16
      // Predicated region
      $region53: #{tpu_custom_call.1} parent=5 // pred_check
        %p580 = pneg %p579
      $region54: #{tpu_custom_call.1} parent=5 // pred_check_branch
        %582 = sbr.rel (%p580) target = $region56
      $region55: #{tpu_custom_call.1} parent=5 // pred_region
        %s583 = ssub.s32 %s16, 2
        // Predicated region
        $region57: #{tpu_custom_call.1} parent=55 // pred_check
          %p584 = pneg %p254
        $region58: #{tpu_custom_call.1} parent=55 // pred_check_branch
          %586 = sbr.rel (%p584) target = $region60
        $region59: #{tpu_custom_call.1} parent=55 // pred_region
          %s587 = sand.u32 %s239, 1
          %s588 = scalar_lea.sflag [#allocation3], %s587
          %s589 = sand.u32 %s239, 1
          %s590 = smul.addr %s589, 8
          %s591 = scalar_lea.vmem [#allocation2], %s590
          %593 = dma.done %s588, 128
        $region60: #{tpu_custom_call.1} parent=55 // pred_fallthru
          _
      $region56: #{tpu_custom_call.1} parent=5 // pred_fallthru
        _
    $region6: #{tpu_custom_call.1} parent=1 // loop_footer
      %s20 = sadd.s32 1, %s16
    $region7: #{tpu_custom_call.1} parent=1 // loop_footer_branch
      %15 = sbr.rel target = $region3
    $region8: #{tpu_custom_call.1} parent=1 // loop_exit
      _
    %594 = vsyncpa [#allocation3], 1
    %s595 = scalar_lea.sflag [#allocation3], 1
    %596 = vsyncpa %s595, 1

</llo_original>
